<compile_context>
chip_gen: v6e
topology: v6e:2x2x1
jax: 0.10.0
libtpu: 0.0.40
codegen_flags: <defaults>
</compile_context>

<pallas_src>
import jax
import jax.numpy as jnp
from jax.experimental import pallas as pl
from jax.experimental.pallas import tpu as pltpu

LANE = 128
SUBLANE = 8


def _cdiv(a, b):
    return -(-a // b)


def _round_up(a, b):
    return _cdiv(a, b) * b


# ----------------------------------------------------------------------------
# In-kernel helpers: one output channel of the 1x1 conv via scalar splats.
# ----------------------------------------------------------------------------
def _tree_sum(terms):
    """Pairwise tree-sum (shortens the dependent FMA chain for the 4 VALUs)."""
    while len(terms) > 1:
        nxt = [terms[i] + terms[i + 1] for i in range(0, len(terms) - 1, 2)]
        if len(terms) % 2:
            nxt.append(terms[-1])
        terms = nxt
    return terms[0]


def _conv1x1_channel(xs, w_ref, b_ref, o):
    """sum_c w[o,c] * x_c + b[o]; w/b are SMEM scalars, x_c dense VMEM tiles."""
    # NOTE: for large Cin/Cout an MXU (spatial-on-M) path would be preferable;
    # for the small channel counts of this module the VPU splat path is
    # HBM-bound already.
    terms = [xs[c] * w_ref[o, c] for c in range(len(xs))]
    return _tree_sum(terms) + b_ref[o]


# ----------------------------------------------------------------------------
# Kernel 1: per-channel sum / sum-of-squares of Y = W@X + b.
#   x_ref:     (nb, cin, tr, 128)  VMEM
#   w_ref:     (cout, cin)         SMEM
#   b_ref:     (cout,)             SMEM
#   stats_ref: (1, cout, 2)        output, written once per image-group
#   sum_sc/sq_sc: (cout, 128)      VMEM lane-partial accumulators
# ----------------------------------------------------------------------------
def _stats_kernel(x_ref, w_ref, b_ref, stats_ref, sum_sc, sq_sc):
    s = pl.program_id(1)
    nb, cin, tr, _ = x_ref.shape
    cout = w_ref.shape[0]

    @pl.when(s == 0)
    def _():
        sum_sc[...] = jnp.zeros_like(sum_sc)
        sq_sc[...] = jnp.zeros_like(sq_sc)

    xs = [x_ref[:, c:c + 1] for c in range(cin)]           # (nb,1,tr,128) each
    for o in range(cout):
        y = _conv1x1_channel(xs, w_ref, b_ref, o)           # (nb,1,tr,128) f32
        yf = y.reshape(nb * tr, LANE)
        # Lane-partial accumulation: bulk VPU adds, cross-lane reduce deferred.
        sum_sc[o:o + 1, :] += jnp.sum(yf, axis=0, keepdims=True)
        sq_sc[o:o + 1, :] += jnp.sum(yf * yf, axis=0, keepdims=True)

    @pl.when(s == pl.num_programs(1) - 1)
    def _():
        stats_ref[0, :, 0:1] = jnp.sum(sum_sc[...], axis=1, keepdims=True)
        stats_ref[0, :, 1:2] = jnp.sum(sq_sc[...], axis=1, keepdims=True)


# ----------------------------------------------------------------------------
# Kernel 2: folded conv (BN baked into W', b') + ReLU, written in the NCHW view.
# ----------------------------------------------------------------------------
def _conv_bn_relu_kernel(x_ref, w_ref, b_ref, o_ref):
    cin = x_ref.shape[1]
    cout = o_ref.shape[1]
    xs = [x_ref[:, c:c + 1] for c in range(cin)]
    for o in range(cout):
        y = _conv1x1_channel(xs, w_ref, b_ref, o)
        o_ref[:, o:o + 1] = jnp.maximum(y, 0.0)


# ----------------------------------------------------------------------------
# Blocking choice
# ----------------------------------------------------------------------------
def _choose_blocking(n, cin, cout, hw, *, target_bytes=6 << 20, vmem_budget=20 << 20):
    """Return (nb, tr, n_s, s_outer):
       nb images per block, tr spatial rows (of 128 lanes) per block,
       n_s spatial blocks per image, s_outer parallel split of n_s (pass 1)."""
    r_img = _cdiv(hw, LANE)
    bytes_per_row = (cin + cout) * LANE * 4                # in + out, f32
    cap = max(SUBLANE, min(vmem_budget // (2 * bytes_per_row),
                           target_bytes // bytes_per_row))
    if r_img <= cap:
        # Whole image per spatial block; pack several images per step if small.
        tr, n_s, nb = r_img, 1, 1
        for d in range(n, 0, -1):
            if n % d == 0 and d * r_img <= cap:
                nb = d
                break
    else:
        nb = 1
        tr0 = max(SUBLANE, (cap // SUBLANE) * SUBLANE)
        n_s = _cdiv(r_img, tr0)
        if n < 2 and n_s > 1 and n_s % 2:                  # help the v7x split
            n_s += 1
        tr = _round_up(_cdiv(r_img, n_s), SUBLANE)         # minimal padding
        n_s = _cdiv(r_img, tr)

    n_groups = n // nb
    s_outer = 1
    if n_groups < 2 and n_s > 1:                           # give core 1 work too
        for cand in (4, 2):
            if n_s % cand == 0:
                s_outer = cand
                break
    return nb, tr, n_s, s_outer


# ----------------------------------------------------------------------------
# Wrapper
# ----------------------------------------------------------------------------
def low_level_encoder(x_nchw, w, b, gamma, beta, *, eps=1e-5):
    """x_nchw: (N, Cin, H, W) f32; w: (Cout, Cin); b, gamma, beta: (Cout,)."""
    n, cin, h, wdt = x_nchw.shape
    cout = w.shape[0]
    hw = h * wdt

    nb, tr, n_s, s_outer = _choose_blocking(n, cin, cout, hw)
    r_pad = n_s * tr
    hw_pad = r_pad * LANE
    n_groups = n // nb
    s_inner = n_s // s_outer
    g1 = n_groups * s_outer

    w32 = w.astype(jnp.float32)
    b32 = b.astype(jnp.float32)

    x3 = x_nchw.reshape(n, cin, hw).astype(jnp.float32)
    if hw_pad != hw:
        x3 = jnp.pad(x3, ((0, 0), (0, 0), (0, hw_pad - hw)))   # zero pad tail
    x4 = x3.reshape(n, cin, r_pad, LANE)                        # free if no pad

    per_step = 4 * nb * (cin + cout) * tr * LANE
    vmem_limit = int(min(max(3 * per_step, 16 << 20), 30 << 20))

    smem_spec = pl.BlockSpec(memory_space=pltpu.MemorySpace.SMEM)

    # ---- pass 1: per-channel sum / sumsq of Y = W@X + b ---------------------
    # TODO(synk): a single-pass VMEM-resident fusion (stats + folded conv
    # without re-reading X) would cut HBM traffic by ~25-33% on v5e/v6e when
    # the whole activation fits in VMEM.
    if s_outer > 1:
        def x_map_p1(gi, si):
            return (gi // s_outer, 0, (gi % s_outer) * s_inner + si, 0)
    else:
        def x_map_p1(gi, si):
            return (gi, 0, si, 0)

    partial = pl.pallas_call(
        _stats_kernel,
        out_shape=jax.ShapeDtypeStruct((g1, cout, 2), jnp.float32),
        grid_spec=pltpu.PrefetchScalarGridSpec(
            num_scalar_prefetch=0,
            grid=(g1, s_inner),
            in_specs=[
                pl.BlockSpec((nb, cin, tr, LANE), x_map_p1),
                smem_spec,      # W
                smem_spec,      # b
            ],
            out_specs=pl.BlockSpec((1, cout, 2), lambda gi, si: (gi, 0, 0)),
            scratch_shapes=[pltpu.VMEM((cout, LANE), jnp.float32),
                            pltpu.VMEM((cout, LANE), jnp.float32)],
        ),
        compiler_params=pltpu.CompilerParams(
            dimension_semantics=("parallel", "arbitrary"),
            vmem_limit_bytes=vmem_limit),
    )(x4, w32, b32)

    # ---- tiny XLA glue: batch stats -> fold BN into the conv ----------------
    stats = jnp.sum(partial, axis=0)                    # (cout, 2)
    pad_cnt = jnp.float32(n * (hw_pad - hw))            # padded x==0 -> y == b
    sum_y = stats[:, 0] - pad_cnt * b32
    sq_y = stats[:, 1] - pad_cnt * b32 * b32
    r = jnp.float32(n * hw)
    mean = sum_y / r
    # TODO(synk): E[y^2]-E[y]^2 in f32 can cancel for extreme |mean|*sqrt(R);
    # a centered / Welford-style accumulation would be numerically safer.
    var = sq_y / r - mean * mean                        # biased (BN training mode)
    scale = gamma.astype(jnp.float32) * jax.lax.rsqrt(var + eps)
    w_fold = w32 * scale[:, None]                       # (cout, cin)
    b_fold = scale * (b32 - mean) + beta.astype(jnp.float32)

    # ---- pass 2: folded conv1x1 + ReLU, output written in the NCHW view -----
    out4 = pl.pallas_call(
        _conv_bn_relu_kernel,
        out_shape=jax.ShapeDtypeStruct((n, cout, r_pad, LANE), jnp.float32),
        grid_spec=pltpu.PrefetchScalarGridSpec(
            num_scalar_prefetch=0,
            grid=(n_groups, n_s),
            in_specs=[
                pl.BlockSpec((nb, cin, tr, LANE), lambda i, s: (i, 0, s, 0)),
                smem_spec,      # W'
                smem_spec,      # b'
            ],
            out_specs=pl.BlockSpec((nb, cout, tr, LANE), lambda i, s: (i, 0, s, 0)),
        ),
        compiler_params=pltpu.CompilerParams(
            dimension_semantics=("parallel", "parallel"),
            vmem_limit_bytes=vmem_limit),
    )(x4, w_fold, b_fold)

    out3 = out4.reshape(n, cout, hw_pad)
    if hw_pad != hw:
        out3 = out3[:, :, :hw]
    return out3.reshape(n, cout, h, wdt)


# ----------------------------------------------------------------------------
# Pure-JAX reference (mirrors PyTorch training-mode forward of the module)
# ----------------------------------------------------------------------------
def _reference(x, w, b, gamma, beta, eps=1e-5):
    y = jnp.einsum('nchw,oc->nohw', x, w) + b[None, :, None, None]
    mean = jnp.mean(y, axis=(0, 2, 3), keepdims=True)
    var = jnp.mean((y - mean) ** 2, axis=(0, 2, 3), keepdims=True)  # biased
    yhat = (y - mean) * jax.lax.rsqrt(var + eps)
    out = yhat * gamma[None, :, None, None] + beta[None, :, None, None]
    return jnp.maximum(out, 0.0)


if __name__ == "__main__":
    # Small, deterministic shapes: batch=2, in_channels=4, out_channels=8, 16x16.
    N, CIN, COUT, H, W = 2, 4, 8, 16, 16

    key = jax.random.PRNGKey(0)
    kx, kw, kb, kg, kbt = jax.random.split(key, 5)

    x = jax.random.normal(kx, (N, CIN, H, W), dtype=jnp.float32)
    # Conv2d(kernel_size=1) weights: (Cout, Cin, 1, 1) -> stored as (Cout, Cin).
    conv_w = jax.random.normal(kw, (COUT, CIN), dtype=jnp.float32) * 0.1
    conv_b = jax.random.normal(kb, (COUT,), dtype=jnp.float32) * 0.1
    # Non-trivial BN affine params to exercise the folding path.
    bn_gamma = 1.0 + 0.1 * jax.random.normal(kg, (COUT,), dtype=jnp.float32)
    bn_beta = 0.1 * jax.random.normal(kbt, (COUT,), dtype=jnp.float32)

    out = low_level_encoder(x, conv_w, conv_b, bn_gamma, bn_beta)
    out = jax.block_until_ready(out)

    ref = _reference(x, conv_w, conv_b, bn_gamma, bn_beta)
    assert out.shape == (N, COUT, H, W)
    assert jnp.allclose(out, ref, atol=1e-4, rtol=1e-4), "mismatch vs reference"

    print("KERNEL_OK")
</pallas_src>

<mosaic_0001>
module attributes {stable_mosaic.version = 11 : i64} {
  func.func @_stats_kernel(%arg0: i32, %arg1: i32, %arg2: memref<2x4x2x128xf32, #tpu.memory_space<vmem>>, %arg3: memref<8x4xf32, #tpu.memory_space<smem>>, %arg4: memref<8xf32, #tpu.memory_space<smem>>, %arg5: memref<1x8x2xf32, #tpu.memory_space<vmem>>, %arg6: memref<8x128xf32, #tpu.memory_space<vmem>>, %arg7: memref<8x128xf32, #tpu.memory_space<vmem>>) attributes {dimension_semantics = [#tpu.dimension_semantics<parallel>, #tpu.dimension_semantics<arbitrary>], iteration_bounds = array<i64: 1, 1>, scalar_prefetch = 0 : i64, scratch_operands = 2 : i64, tpu.core_type = #tpu.core_type<tc>, window_params = [{transform_indices = @transform_0, window_bounds = array<i64: 2, 4, 2, 128>}, {transform_indices = @transform_1, window_bounds = array<i64: 8, 4>}, {transform_indices = @transform_2, window_bounds = array<i64: 8>}, {transform_indices = @transform_3, window_bounds = array<i64: 1, 8, 2>}]} {
    %c0_i32 = arith.constant 0 : i32
    %0 = arith.cmpi eq, %arg1, %c0_i32 : i32
    %1 = arith.extui %0 : i1 to i32
    %c0_i32_0 = arith.constant 0 : i32
    %2 = arith.cmpi ne, %1, %c0_i32_0 : i32
    scf.if %2 {
      %cst_162 = arith.constant 0.000000e+00 : f32
      %250 = vector.broadcast %cst_162 : f32 to vector<8x128xf32>
      %c0_163 = arith.constant 0 : index
      %c0_164 = arith.constant 0 : index
      %251 = vector.load %arg6[%c0_163, %c0_164] : memref<8x128xf32, #tpu.memory_space<vmem>>, vector<8x128xf32>
      tpu.vector_store %arg6[%c0_163, %c0_164], %250 {strides = array<i32>} : memref<8x128xf32, #tpu.memory_space<vmem>>, vector<8x128xf32>,
      %cst_165 = arith.constant 0.000000e+00 : f32
      %252 = vector.broadcast %cst_165 : f32 to vector<8x128xf32>
      %c0_166 = arith.constant 0 : index
      %c0_167 = arith.constant 0 : index
      %253 = vector.load %arg7[%c0_166, %c0_167] : memref<8x128xf32, #tpu.memory_space<vmem>>, vector<8x128xf32>
      tpu.vector_store %arg7[%c0_166, %c0_167], %252 {strides = array<i32>} : memref<8x128xf32, #tpu.memory_space<vmem>>, vector<8x128xf32>,
    } else {
    }
    %c0 = arith.constant 0 : index
    %c0_1 = arith.constant 0 : index
    %c0_2 = arith.constant 0 : index
    %c0_3 = arith.constant 0 : index
    %3 = vector.load %arg2[%c0, %c0_1, %c0_2, %c0_3] : memref<2x4x2x128xf32, #tpu.memory_space<vmem>>, vector<2x1x2x128xf32>
    %c0_4 = arith.constant 0 : index
    %c1 = arith.constant 1 : index
    %c0_5 = arith.constant 0 : index
    %c0_6 = arith.constant 0 : index
    %4 = vector.load %arg2[%c0_4, %c1, %c0_5, %c0_6] : memref<2x4x2x128xf32, #tpu.memory_space<vmem>>, vector<2x1x2x128xf32>
    %c0_7 = arith.constant 0 : index
    %c2 = arith.constant 2 : index
    %c0_8 = arith.constant 0 : index
    %c0_9 = arith.constant 0 : index
    %5 = vector.load %arg2[%c0_7, %c2, %c0_8, %c0_9] : memref<2x4x2x128xf32, #tpu.memory_space<vmem>>, vector<2x1x2x128xf32>
    %c0_10 = arith.constant 0 : index
    %c3 = arith.constant 3 : index
    %c0_11 = arith.constant 0 : index
    %c0_12 = arith.constant 0 : index
    %6 = vector.load %arg2[%c0_10, %c3, %c0_11, %c0_12] : memref<2x4x2x128xf32, #tpu.memory_space<vmem>>, vector<2x1x2x128xf32>
    %c0_13 = arith.constant 0 : index
    %c0_14 = arith.constant 0 : index
    %7 = memref.load %arg3[%c0_13, %c0_14] : memref<8x4xf32, #tpu.memory_space<smem>>
    %8 = vector.broadcast %7 : f32 to vector<2x1x2x128xf32>
    %9 = arith.mulf %3, %8 : vector<2x1x2x128xf32>
    %c0_15 = arith.constant 0 : index
    %c1_16 = arith.constant 1 : index
    %10 = memref.load %arg3[%c0_15, %c1_16] : memref<8x4xf32, #tpu.memory_space<smem>>
    %11 = vector.broadcast %10 : f32 to vector<2x1x2x128xf32>
    %12 = arith.mulf %4, %11 : vector<2x1x2x128xf32>
    %c0_17 = arith.constant 0 : index
    %c2_18 = arith.constant 2 : index
    %13 = memref.load %arg3[%c0_17, %c2_18] : memref<8x4xf32, #tpu.memory_space<smem>>
    %14 = vector.broadcast %13 : f32 to vector<2x1x2x128xf32>
    %15 = arith.mulf %5, %14 : vector<2x1x2x128xf32>
    %c0_19 = arith.constant 0 : index
    %c3_20 = arith.constant 3 : index
    %16 = memref.load %arg3[%c0_19, %c3_20] : memref<8x4xf32, #tpu.memory_space<smem>>
    %17 = vector.broadcast %16 : f32 to vector<2x1x2x128xf32>
    %18 = arith.mulf %6, %17 : vector<2x1x2x128xf32>
    %19 = arith.addf %9, %12 : vector<2x1x2x128xf32>
    %20 = arith.addf %15, %18 : vector<2x1x2x128xf32>
    %21 = arith.addf %19, %20 : vector<2x1x2x128xf32>
    %c0_21 = arith.constant 0 : index
    %22 = memref.load %arg4[%c0_21] : memref<8xf32, #tpu.memory_space<smem>>
    %23 = vector.broadcast %22 : f32 to vector<2x1x2x128xf32>
    %24 = arith.addf %21, %23 : vector<2x1x2x128xf32>
    %25 = vector.shape_cast %24 : vector<2x1x2x128xf32> to vector<4x128xf32>
    %c0_22 = arith.constant 0 : index
    %c0_23 = arith.constant 0 : index
    %26 = vector.load %arg6[%c0_22, %c0_23] : memref<8x128xf32, #tpu.memory_space<vmem>>, vector<1x128xf32>
    %cst = arith.constant dense<0.000000e+00> : vector<128xf32>
    %27 = vector.multi_reduction <add>, %25, %cst [0] : vector<4x128xf32> to vector<128xf32>
    %28 = vector.shape_cast %27 : vector<128xf32> to vector<1x128xf32>
    %29 = arith.addf %26, %28 : vector<1x128xf32>
    %c0_24 = arith.constant 0 : index
    %c0_25 = arith.constant 0 : index
    %30 = vector.load %arg6[%c0_24, %c0_25] : memref<8x128xf32, #tpu.memory_space<vmem>>, vector<1x128xf32>
    tpu.vector_store %arg6[%c0_24, %c0_25], %29 {strides = array<i32>} : memref<8x128xf32, #tpu.memory_space<vmem>>, vector<1x128xf32>,
    %c0_26 = arith.constant 0 : index
    %c0_27 = arith.constant 0 : index
    %31 = vector.load %arg7[%c0_26, %c0_27] : memref<8x128xf32, #tpu.memory_space<vmem>>, vector<1x128xf32>
    %32 = arith.mulf %25, %25 : vector<4x128xf32>
    %cst_28 = arith.constant dense<0.000000e+00> : vector<128xf32>
    %33 = vector.multi_reduction <add>, %32, %cst_28 [0] : vector<4x128xf32> to vector<128xf32>
    %34 = vector.shape_cast %33 : vector<128xf32> to vector<1x128xf32>
    %35 = arith.addf %31, %34 : vector<1x128xf32>
    %c0_29 = arith.constant 0 : index
    %c0_30 = arith.constant 0 : index
    %36 = vector.load %arg7[%c0_29, %c0_30] : memref<8x128xf32, #tpu.memory_space<vmem>>, vector<1x128xf32>
    tpu.vector_store %arg7[%c0_29, %c0_30], %35 {strides = array<i32>} : memref<8x128xf32, #tpu.memory_space<vmem>>, vector<1x128xf32>,
    %c1_31 = arith.constant 1 : index
    %c0_32 = arith.constant 0 : index
    %37 = memref.load %arg3[%c1_31, %c0_32] : memref<8x4xf32, #tpu.memory_space<smem>>
    %38 = vector.broadcast %37 : f32 to vector<2x1x2x128xf32>
    %39 = arith.mulf %3, %38 : vector<2x1x2x128xf32>
    %c1_33 = arith.constant 1 : index
    %c1_34 = arith.constant 1 : index
    %40 = memref.load %arg3[%c1_33, %c1_34] : memref<8x4xf32, #tpu.memory_space<smem>>
    %41 = vector.broadcast %40 : f32 to vector<2x1x2x128xf32>
    %42 = arith.mulf %4, %41 : vector<2x1x2x128xf32>
    %c1_35 = arith.constant 1 : index
    %c2_36 = arith.constant 2 : index
    %43 = memref.load %arg3[%c1_35, %c2_36] : memref<8x4xf32, #tpu.memory_space<smem>>
    %44 = vector.broadcast %43 : f32 to vector<2x1x2x128xf32>
    %45 = arith.mulf %5, %44 : vector<2x1x2x128xf32>
    %c1_37 = arith.constant 1 : index
    %c3_38 = arith.constant 3 : index
    %46 = memref.load %arg3[%c1_37, %c3_38] : memref<8x4xf32, #tpu.memory_space<smem>>
    %47 = vector.broadcast %46 : f32 to vector<2x1x2x128xf32>
    %48 = arith.mulf %6, %47 : vector<2x1x2x128xf32>
    %49 = arith.addf %39, %42 : vector<2x1x2x128xf32>
    %50 = arith.addf %45, %48 : vector<2x1x2x128xf32>
    %51 = arith.addf %49, %50 : vector<2x1x2x128xf32>
    %c1_39 = arith.constant 1 : index
    %52 = memref.load %arg4[%c1_39] : memref<8xf32, #tpu.memory_space<smem>>
    %53 = vector.broadcast %52 : f32 to vector<2x1x2x128xf32>
    %54 = arith.addf %51, %53 : vector<2x1x2x128xf32>
    %55 = vector.shape_cast %54 : vector<2x1x2x128xf32> to vector<4x128xf32>
    %c1_40 = arith.constant 1 : index
    %c0_41 = arith.constant 0 : index
    %56 = vector.load %arg6[%c1_40, %c0_41] : memref<8x128xf32, #tpu.memory_space<vmem>>, vector<1x128xf32>
    %cst_42 = arith.constant dense<0.000000e+00> : vector<128xf32>
    %57 = vector.multi_reduction <add>, %55, %cst_42 [0] : vector<4x128xf32> to vector<128xf32>
    %58 = vector.shape_cast %57 : vector<128xf32> to vector<1x128xf32>
    %59 = arith.addf %56, %58 : vector<1x128xf32>
    %c1_43 = arith.constant 1 : index
    %c0_44 = arith.constant 0 : index
    %60 = vector.load %arg6[%c1_43, %c0_44] : memref<8x128xf32, #tpu.memory_space<vmem>>, vector<1x128xf32>
    tpu.vector_store %arg6[%c1_43, %c0_44], %59 {strides = array<i32>} : memref<8x128xf32, #tpu.memory_space<vmem>>, vector<1x128xf32>,
    %c1_45 = arith.constant 1 : index
    %c0_46 = arith.constant 0 : index
    %61 = vector.load %arg7[%c1_45, %c0_46] : memref<8x128xf32, #tpu.memory_space<vmem>>, vector<1x128xf32>
    %62 = arith.mulf %55, %55 : vector<4x128xf32>
    %cst_47 = arith.constant dense<0.000000e+00> : vector<128xf32>
    %63 = vector.multi_reduction <add>, %62, %cst_47 [0] : vector<4x128xf32> to vector<128xf32>
    %64 = vector.shape_cast %63 : vector<128xf32> to vector<1x128xf32>
    %65 = arith.addf %61, %64 : vector<1x128xf32>
    %c1_48 = arith.constant 1 : index
    %c0_49 = arith.constant 0 : index
    %66 = vector.load %arg7[%c1_48, %c0_49] : memref<8x128xf32, #tpu.memory_space<vmem>>, vector<1x128xf32>
    tpu.vector_store %arg7[%c1_48, %c0_49], %65 {strides = array<i32>} : memref<8x128xf32, #tpu.memory_space<vmem>>, vector<1x128xf32>,
    %c2_50 = arith.constant 2 : index
    %c0_51 = arith.constant 0 : index
    %67 = memref.load %arg3[%c2_50, %c0_51] : memref<8x4xf32, #tpu.memory_space<smem>>
    %68 = vector.broadcast %67 : f32 to vector<2x1x2x128xf32>
    %69 = arith.mulf %3, %68 : vector<2x1x2x128xf32>
    %c2_52 = arith.constant 2 : index
    %c1_53 = arith.constant 1 : index
    %70 = memref.load %arg3[%c2_52, %c1_53] : memref<8x4xf32, #tpu.memory_space<smem>>
    %71 = vector.broadcast %70 : f32 to vector<2x1x2x128xf32>
    %72 = arith.mulf %4, %71 : vector<2x1x2x128xf32>
    %c2_54 = arith.constant 2 : index
    %c2_55 = arith.constant 2 : index
    %73 = memref.load %arg3[%c2_54, %c2_55] : memref<8x4xf32, #tpu.memory_space<smem>>
    %74 = vector.broadcast %73 : f32 to vector<2x1x2x128xf32>
    %75 = arith.mulf %5, %74 : vector<2x1x2x128xf32>
    %c2_56 = arith.constant 2 : index
    %c3_57 = arith.constant 3 : index
    %76 = memref.load %arg3[%c2_56, %c3_57] : memref<8x4xf32, #tpu.memory_space<smem>>
    %77 = vector.broadcast %76 : f32 to vector<2x1x2x128xf32>
    %78 = arith.mulf %6, %77 : vector<2x1x2x128xf32>
    %79 = arith.addf %69, %72 : vector<2x1x2x128xf32>
    %80 = arith.addf %75, %78 : vector<2x1x2x128xf32>
    %81 = arith.addf %79, %80 : vector<2x1x2x128xf32>
    %c2_58 = arith.constant 2 : index
    %82 = memref.load %arg4[%c2_58] : memref<8xf32, #tpu.memory_space<smem>>
    %83 = vector.broadcast %82 : f32 to vector<2x1x2x128xf32>
    %84 = arith.addf %81, %83 : vector<2x1x2x128xf32>
    %85 = vector.shape_cast %84 : vector<2x1x2x128xf32> to vector<4x128xf32>
    %c2_59 = arith.constant 2 : index
    %c0_60 = arith.constant 0 : index
    %86 = vector.load %arg6[%c2_59, %c0_60] : memref<8x128xf32, #tpu.memory_space<vmem>>, vector<1x128xf32>
    %cst_61 = arith.constant dense<0.000000e+00> : vector<128xf32>
    %87 = vector.multi_reduction <add>, %85, %cst_61 [0] : vector<4x128xf32> to vector<128xf32>
    %88 = vector.shape_cast %87 : vector<128xf32> to vector<1x128xf32>
    %89 = arith.addf %86, %88 : vector<1x128xf32>
    %c2_62 = arith.constant 2 : index
    %c0_63 = arith.constant 0 : index
    %90 = vector.load %arg6[%c2_62, %c0_63] : memref<8x128xf32, #tpu.memory_space<vmem>>, vector<1x128xf32>
    tpu.vector_store %arg6[%c2_62, %c0_63], %89 {strides = array<i32>} : memref<8x128xf32, #tpu.memory_space<vmem>>, vector<1x128xf32>,
    %c2_64 = arith.constant 2 : index
    %c0_65 = arith.constant 0 : index
    %91 = vector.load %arg7[%c2_64, %c0_65] : memref<8x128xf32, #tpu.memory_space<vmem>>, vector<1x128xf32>
    %92 = arith.mulf %85, %85 : vector<4x128xf32>
    %cst_66 = arith.constant dense<0.000000e+00> : vector<128xf32>
    %93 = vector.multi_reduction <add>, %92, %cst_66 [0] : vector<4x128xf32> to vector<128xf32>
    %94 = vector.shape_cast %93 : vector<128xf32> to vector<1x128xf32>
    %95 = arith.addf %91, %94 : vector<1x128xf32>
    %c2_67 = arith.constant 2 : index
    %c0_68 = arith.constant 0 : index
    %96 = vector.load %arg7[%c2_67, %c0_68] : memref<8x128xf32, #tpu.memory_space<vmem>>, vector<1x128xf32>
    tpu.vector_store %arg7[%c2_67, %c0_68], %95 {strides = array<i32>} : memref<8x128xf32, #tpu.memory_space<vmem>>, vector<1x128xf32>,
    %c3_69 = arith.constant 3 : index
    %c0_70 = arith.constant 0 : index
    %97 = memref.load %arg3[%c3_69, %c0_70] : memref<8x4xf32, #tpu.memory_space<smem>>
    %98 = vector.broadcast %97 : f32 to vector<2x1x2x128xf32>
    %99 = arith.mulf %3, %98 : vector<2x1x2x128xf32>
    %c3_71 = arith.constant 3 : index
    %c1_72 = arith.constant 1 : index
    %100 = memref.load %arg3[%c3_71, %c1_72] : memref<8x4xf32, #tpu.memory_space<smem>>
    %101 = vector.broadcast %100 : f32 to vector<2x1x2x128xf32>
    %102 = arith.mulf %4, %101 : vector<2x1x2x128xf32>
    %c3_73 = arith.constant 3 : index
    %c2_74 = arith.constant 2 : index
    %103 = memref.load %arg3[%c3_73, %c2_74] : memref<8x4xf32, #tpu.memory_space<smem>>
    %104 = vector.broadcast %103 : f32 to vector<2x1x2x128xf32>
    %105 = arith.mulf %5, %104 : vector<2x1x2x128xf32>
    %c3_75 = arith.constant 3 : index
    %c3_76 = arith.constant 3 : index
    %106 = memref.load %arg3[%c3_75, %c3_76] : memref<8x4xf32, #tpu.memory_space<smem>>
    %107 = vector.broadcast %106 : f32 to vector<2x1x2x128xf32>
    %108 = arith.mulf %6, %107 : vector<2x1x2x128xf32>
    %109 = arith.addf %99, %102 : vector<2x1x2x128xf32>
    %110 = arith.addf %105, %108 : vector<2x1x2x128xf32>
    %111 = arith.addf %109, %110 : vector<2x1x2x128xf32>
    %c3_77 = arith.constant 3 : index
    %112 = memref.load %arg4[%c3_77] : memref<8xf32, #tpu.memory_space<smem>>
    %113 = vector.broadcast %112 : f32 to vector<2x1x2x128xf32>
    %114 = arith.addf %111, %113 : vector<2x1x2x128xf32>
    %115 = vector.shape_cast %114 : vector<2x1x2x128xf32> to vector<4x128xf32>
    %c3_78 = arith.constant 3 : index
    %c0_79 = arith.constant 0 : index
    %116 = vector.load %arg6[%c3_78, %c0_79] : memref<8x128xf32, #tpu.memory_space<vmem>>, vector<1x128xf32>
    %cst_80 = arith.constant dense<0.000000e+00> : vector<128xf32>
    %117 = vector.multi_reduction <add>, %115, %cst_80 [0] : vector<4x128xf32> to vector<128xf32>
    %118 = vector.shape_cast %117 : vector<128xf32> to vector<1x128xf32>
    %119 = arith.addf %116, %118 : vector<1x128xf32>
    %c3_81 = arith.constant 3 : index
    %c0_82 = arith.constant 0 : index
    %120 = vector.load %arg6[%c3_81, %c0_82] : memref<8x128xf32, #tpu.memory_space<vmem>>, vector<1x128xf32>
    tpu.vector_store %arg6[%c3_81, %c0_82], %119 {strides = array<i32>} : memref<8x128xf32, #tpu.memory_space<vmem>>, vector<1x128xf32>,
    %c3_83 = arith.constant 3 : index
    %c0_84 = arith.constant 0 : index
    %121 = vector.load %arg7[%c3_83, %c0_84] : memref<8x128xf32, #tpu.memory_space<vmem>>, vector<1x128xf32>
    %122 = arith.mulf %115, %115 : vector<4x128xf32>
    %cst_85 = arith.constant dense<0.000000e+00> : vector<128xf32>
    %123 = vector.multi_reduction <add>, %122, %cst_85 [0] : vector<4x128xf32> to vector<128xf32>
    %124 = vector.shape_cast %123 : vector<128xf32> to vector<1x128xf32>
    %125 = arith.addf %121, %124 : vector<1x128xf32>
    %c3_86 = arith.constant 3 : index
    %c0_87 = arith.constant 0 : index
    %126 = vector.load %arg7[%c3_86, %c0_87] : memref<8x128xf32, #tpu.memory_space<vmem>>, vector<1x128xf32>
    tpu.vector_store %arg7[%c3_86, %c0_87], %125 {strides = array<i32>} : memref<8x128xf32, #tpu.memory_space<vmem>>, vector<1x128xf32>,
    %c4 = arith.constant 4 : index
    %c0_88 = arith.constant 0 : index
    %127 = memref.load %arg3[%c4, %c0_88] : memref<8x4xf32, #tpu.memory_space<smem>>
    %128 = vector.broadcast %127 : f32 to vector<2x1x2x128xf32>
    %129 = arith.mulf %3, %128 : vector<2x1x2x128xf32>
    %c4_89 = arith.constant 4 : index
    %c1_90 = arith.constant 1 : index
    %130 = memref.load %arg3[%c4_89, %c1_90] : memref<8x4xf32, #tpu.memory_space<smem>>
    %131 = vector.broadcast %130 : f32 to vector<2x1x2x128xf32>
    %132 = arith.mulf %4, %131 : vector<2x1x2x128xf32>
    %c4_91 = arith.constant 4 : index
    %c2_92 = arith.constant 2 : index
    %133 = memref.load %arg3[%c4_91, %c2_92] : memref<8x4xf32, #tpu.memory_space<smem>>
    %134 = vector.broadcast %133 : f32 to vector<2x1x2x128xf32>
    %135 = arith.mulf %5, %134 : vector<2x1x2x128xf32>
    %c4_93 = arith.constant 4 : index
    %c3_94 = arith.constant 3 : index
    %136 = memref.load %arg3[%c4_93, %c3_94] : memref<8x4xf32, #tpu.memory_space<smem>>
    %137 = vector.broadcast %136 : f32 to vector<2x1x2x128xf32>
    %138 = arith.mulf %6, %137 : vector<2x1x2x128xf32>
    %139 = arith.addf %129, %132 : vector<2x1x2x128xf32>
    %140 = arith.addf %135, %138 : vector<2x1x2x128xf32>
    %141 = arith.addf %139, %140 : vector<2x1x2x128xf32>
    %c4_95 = arith.constant 4 : index
    %142 = memref.load %arg4[%c4_95] : memref<8xf32, #tpu.memory_space<smem>>
    %143 = vector.broadcast %142 : f32 to vector<2x1x2x128xf32>
    %144 = arith.addf %141, %143 : vector<2x1x2x128xf32>
    %145 = vector.shape_cast %144 : vector<2x1x2x128xf32> to vector<4x128xf32>
    %c4_96 = arith.constant 4 : index
    %c0_97 = arith.constant 0 : index
    %146 = vector.load %arg6[%c4_96, %c0_97] : memref<8x128xf32, #tpu.memory_space<vmem>>, vector<1x128xf32>
    %cst_98 = arith.constant dense<0.000000e+00> : vector<128xf32>
    %147 = vector.multi_reduction <add>, %145, %cst_98 [0] : vector<4x128xf32> to vector<128xf32>
    %148 = vector.shape_cast %147 : vector<128xf32> to vector<1x128xf32>
    %149 = arith.addf %146, %148 : vector<1x128xf32>
    %c4_99 = arith.constant 4 : index
    %c0_100 = arith.constant 0 : index
    %150 = vector.load %arg6[%c4_99, %c0_100] : memref<8x128xf32, #tpu.memory_space<vmem>>, vector<1x128xf32>
    tpu.vector_store %arg6[%c4_99, %c0_100], %149 {strides = array<i32>} : memref<8x128xf32, #tpu.memory_space<vmem>>, vector<1x128xf32>,
    %c4_101 = arith.constant 4 : index
    %c0_102 = arith.constant 0 : index
    %151 = vector.load %arg7[%c4_101, %c0_102] : memref<8x128xf32, #tpu.memory_space<vmem>>, vector<1x128xf32>
    %152 = arith.mulf %145, %145 : vector<4x128xf32>
    %cst_103 = arith.constant dense<0.000000e+00> : vector<128xf32>
    %153 = vector.multi_reduction <add>, %152, %cst_103 [0] : vector<4x128xf32> to vector<128xf32>
    %154 = vector.shape_cast %153 : vector<128xf32> to vector<1x128xf32>
    %155 = arith.addf %151, %154 : vector<1x128xf32>
    %c4_104 = arith.constant 4 : index
    %c0_105 = arith.constant 0 : index
    %156 = vector.load %arg7[%c4_104, %c0_105] : memref<8x128xf32, #tpu.memory_space<vmem>>, vector<1x128xf32>
    tpu.vector_store %arg7[%c4_104, %c0_105], %155 {strides = array<i32>} : memref<8x128xf32, #tpu.memory_space<vmem>>, vector<1x128xf32>,
    %c5 = arith.constant 5 : index
    %c0_106 = arith.constant 0 : index
    %157 = memref.load %arg3[%c5, %c0_106] : memref<8x4xf32, #tpu.memory_space<smem>>
    %158 = vector.broadcast %157 : f32 to vector<2x1x2x128xf32>
    %159 = arith.mulf %3, %158 : vector<2x1x2x128xf32>
    %c5_107 = arith.constant 5 : index
    %c1_108 = arith.constant 1 : index
    %160 = memref.load %arg3[%c5_107, %c1_108] : memref<8x4xf32, #tpu.memory_space<smem>>
    %161 = vector.broadcast %160 : f32 to vector<2x1x2x128xf32>
    %162 = arith.mulf %4, %161 : vector<2x1x2x128xf32>
    %c5_109 = arith.constant 5 : index
    %c2_110 = arith.constant 2 : index
    %163 = memref.load %arg3[%c5_109, %c2_110] : memref<8x4xf32, #tpu.memory_space<smem>>
    %164 = vector.broadcast %163 : f32 to vector<2x1x2x128xf32>
    %165 = arith.mulf %5, %164 : vector<2x1x2x128xf32>
    %c5_111 = arith.constant 5 : index
    %c3_112 = arith.constant 3 : index
    %166 = memref.load %arg3[%c5_111, %c3_112] : memref<8x4xf32, #tpu.memory_space<smem>>
    %167 = vector.broadcast %166 : f32 to vector<2x1x2x128xf32>
    %168 = arith.mulf %6, %167 : vector<2x1x2x128xf32>
    %169 = arith.addf %159, %162 : vector<2x1x2x128xf32>
    %170 = arith.addf %165, %168 : vector<2x1x2x128xf32>
    %171 = arith.addf %169, %170 : vector<2x1x2x128xf32>
    %c5_113 = arith.constant 5 : index
    %172 = memref.load %arg4[%c5_113] : memref<8xf32, #tpu.memory_space<smem>>
    %173 = vector.broadcast %172 : f32 to vector<2x1x2x128xf32>
    %174 = arith.addf %171, %173 : vector<2x1x2x128xf32>
    %175 = vector.shape_cast %174 : vector<2x1x2x128xf32> to vector<4x128xf32>
    %c5_114 = arith.constant 5 : index
    %c0_115 = arith.constant 0 : index
    %176 = vector.load %arg6[%c5_114, %c0_115] : memref<8x128xf32, #tpu.memory_space<vmem>>, vector<1x128xf32>
    %cst_116 = arith.constant dense<0.000000e+00> : vector<128xf32>
    %177 = vector.multi_reduction <add>, %175, %cst_116 [0] : vector<4x128xf32> to vector<128xf32>
    %178 = vector.shape_cast %177 : vector<128xf32> to vector<1x128xf32>
    %179 = arith.addf %176, %178 : vector<1x128xf32>
    %c5_117 = arith.constant 5 : index
    %c0_118 = arith.constant 0 : index
    %180 = vector.load %arg6[%c5_117, %c0_118] : memref<8x128xf32, #tpu.memory_space<vmem>>, vector<1x128xf32>
    tpu.vector_store %arg6[%c5_117, %c0_118], %179 {strides = array<i32>} : memref<8x128xf32, #tpu.memory_space<vmem>>, vector<1x128xf32>,
    %c5_119 = arith.constant 5 : index
    %c0_120 = arith.constant 0 : index
    %181 = vector.load %arg7[%c5_119, %c0_120] : memref<8x128xf32, #tpu.memory_space<vmem>>, vector<1x128xf32>
    %182 = arith.mulf %175, %175 : vector<4x128xf32>
    %cst_121 = arith.constant dense<0.000000e+00> : vector<128xf32>
    %183 = vector.multi_reduction <add>, %182, %cst_121 [0] : vector<4x128xf32> to vector<128xf32>
    %184 = vector.shape_cast %183 : vector<128xf32> to vector<1x128xf32>
    %185 = arith.addf %181, %184 : vector<1x128xf32>
    %c5_122 = arith.constant 5 : index
    %c0_123 = arith.constant 0 : index
    %186 = vector.load %arg7[%c5_122, %c0_123] : memref<8x128xf32, #tpu.memory_space<vmem>>, vector<1x128xf32>
    tpu.vector_store %arg7[%c5_122, %c0_123], %185 {strides = array<i32>} : memref<8x128xf32, #tpu.memory_space<vmem>>, vector<1x128xf32>,
    %c6 = arith.constant 6 : index
    %c0_124 = arith.constant 0 : index
    %187 = memref.load %arg3[%c6, %c0_124] : memref<8x4xf32, #tpu.memory_space<smem>>
    %188 = vector.broadcast %187 : f32 to vector<2x1x2x128xf32>
    %189 = arith.mulf %3, %188 : vector<2x1x2x128xf32>
    %c6_125 = arith.constant 6 : index
    %c1_126 = arith.constant 1 : index
    %190 = memref.load %arg3[%c6_125, %c1_126] : memref<8x4xf32, #tpu.memory_space<smem>>
    %191 = vector.broadcast %190 : f32 to vector<2x1x2x128xf32>
    %192 = arith.mulf %4, %191 : vector<2x1x2x128xf32>
    %c6_127 = arith.constant 6 : index
    %c2_128 = arith.constant 2 : index
    %193 = memref.load %arg3[%c6_127, %c2_128] : memref<8x4xf32, #tpu.memory_space<smem>>
    %194 = vector.broadcast %193 : f32 to vector<2x1x2x128xf32>
    %195 = arith.mulf %5, %194 : vector<2x1x2x128xf32>
    %c6_129 = arith.constant 6 : index
    %c3_130 = arith.constant 3 : index
    %196 = memref.load %arg3[%c6_129, %c3_130] : memref<8x4xf32, #tpu.memory_space<smem>>
    %197 = vector.broadcast %196 : f32 to vector<2x1x2x128xf32>
    %198 = arith.mulf %6, %197 : vector<2x1x2x128xf32>
    %199 = arith.addf %189, %192 : vector<2x1x2x128xf32>
    %200 = arith.addf %195, %198 : vector<2x1x2x128xf32>
    %201 = arith.addf %199, %200 : vector<2x1x2x128xf32>
    %c6_131 = arith.constant 6 : index
    %202 = memref.load %arg4[%c6_131] : memref<8xf32, #tpu.memory_space<smem>>
    %203 = vector.broadcast %202 : f32 to vector<2x1x2x128xf32>
    %204 = arith.addf %201, %203 : vector<2x1x2x128xf32>
    %205 = vector.shape_cast %204 : vector<2x1x2x128xf32> to vector<4x128xf32>
    %c6_132 = arith.constant 6 : index
    %c0_133 = arith.constant 0 : index
    %206 = vector.load %arg6[%c6_132, %c0_133] : memref<8x128xf32, #tpu.memory_space<vmem>>, vector<1x128xf32>
    %cst_134 = arith.constant dense<0.000000e+00> : vector<128xf32>
    %207 = vector.multi_reduction <add>, %205, %cst_134 [0] : vector<4x128xf32> to vector<128xf32>
    %208 = vector.shape_cast %207 : vector<128xf32> to vector<1x128xf32>
    %209 = arith.addf %206, %208 : vector<1x128xf32>
    %c6_135 = arith.constant 6 : index
    %c0_136 = arith.constant 0 : index
    %210 = vector.load %arg6[%c6_135, %c0_136] : memref<8x128xf32, #tpu.memory_space<vmem>>, vector<1x128xf32>
    tpu.vector_store %arg6[%c6_135, %c0_136], %209 {strides = array<i32>} : memref<8x128xf32, #tpu.memory_space<vmem>>, vector<1x128xf32>,
    %c6_137 = arith.constant 6 : index
    %c0_138 = arith.constant 0 : index
    %211 = vector.load %arg7[%c6_137, %c0_138] : memref<8x128xf32, #tpu.memory_space<vmem>>, vector<1x128xf32>
    %212 = arith.mulf %205, %205 : vector<4x128xf32>
    %cst_139 = arith.constant dense<0.000000e+00> : vector<128xf32>
    %213 = vector.multi_reduction <add>, %212, %cst_139 [0] : vector<4x128xf32> to vector<128xf32>
    %214 = vector.shape_cast %213 : vector<128xf32> to vector<1x128xf32>
    %215 = arith.addf %211, %214 : vector<1x128xf32>
    %c6_140 = arith.constant 6 : index
    %c0_141 = arith.constant 0 : index
    %216 = vector.load %arg7[%c6_140, %c0_141] : memref<8x128xf32, #tpu.memory_space<vmem>>, vector<1x128xf32>
    tpu.vector_store %arg7[%c6_140, %c0_141], %215 {strides = array<i32>} : memref<8x128xf32, #tpu.memory_space<vmem>>, vector<1x128xf32>,
    %c7 = arith.constant 7 : index
    %c0_142 = arith.constant 0 : index
    %217 = memref.load %arg3[%c7, %c0_142] : memref<8x4xf32, #tpu.memory_space<smem>>
    %218 = vector.broadcast %217 : f32 to vector<2x1x2x128xf32>
    %219 = arith.mulf %3, %218 : vector<2x1x2x128xf32>
    %c7_143 = arith.constant 7 : index
    %c1_144 = arith.constant 1 : index
    %220 = memref.load %arg3[%c7_143, %c1_144] : memref<8x4xf32, #tpu.memory_space<smem>>
    %221 = vector.broadcast %220 : f32 to vector<2x1x2x128xf32>
    %222 = arith.mulf %4, %221 : vector<2x1x2x128xf32>
    %c7_145 = arith.constant 7 : index
    %c2_146 = arith.constant 2 : index
    %223 = memref.load %arg3[%c7_145, %c2_146] : memref<8x4xf32, #tpu.memory_space<smem>>
    %224 = vector.broadcast %223 : f32 to vector<2x1x2x128xf32>
    %225 = arith.mulf %5, %224 : vector<2x1x2x128xf32>
    %c7_147 = arith.constant 7 : index
    %c3_148 = arith.constant 3 : index
    %226 = memref.load %arg3[%c7_147, %c3_148] : memref<8x4xf32, #tpu.memory_space<smem>>
    %227 = vector.broadcast %226 : f32 to vector<2x1x2x128xf32>
    %228 = arith.mulf %6, %227 : vector<2x1x2x128xf32>
    %229 = arith.addf %219, %222 : vector<2x1x2x128xf32>
    %230 = arith.addf %225, %228 : vector<2x1x2x128xf32>
    %231 = arith.addf %229, %230 : vector<2x1x2x128xf32>
    %c7_149 = arith.constant 7 : index
    %232 = memref.load %arg4[%c7_149] : memref<8xf32, #tpu.memory_space<smem>>
    %233 = vector.broadcast %232 : f32 to vector<2x1x2x128xf32>
    %234 = arith.addf %231, %233 : vector<2x1x2x128xf32>
    %235 = vector.shape_cast %234 : vector<2x1x2x128xf32> to vector<4x128xf32>
    %c7_150 = arith.constant 7 : index
    %c0_151 = arith.constant 0 : index
    %236 = vector.load %arg6[%c7_150, %c0_151] : memref<8x128xf32, #tpu.memory_space<vmem>>, vector<1x128xf32>
    %cst_152 = arith.constant dense<0.000000e+00> : vector<128xf32>
    %237 = vector.multi_reduction <add>, %235, %cst_152 [0] : vector<4x128xf32> to vector<128xf32>
    %238 = vector.shape_cast %237 : vector<128xf32> to vector<1x128xf32>
    %239 = arith.addf %236, %238 : vector<1x128xf32>
    %c7_153 = arith.constant 7 : index
    %c0_154 = arith.constant 0 : index
    %240 = vector.load %arg6[%c7_153, %c0_154] : memref<8x128xf32, #tpu.memory_space<vmem>>, vector<1x128xf32>
    tpu.vector_store %arg6[%c7_153, %c0_154], %239 {strides = array<i32>} : memref<8x128xf32, #tpu.memory_space<vmem>>, vector<1x128xf32>,
    %c7_155 = arith.constant 7 : index
    %c0_156 = arith.constant 0 : index
    %241 = vector.load %arg7[%c7_155, %c0_156] : memref<8x128xf32, #tpu.memory_space<vmem>>, vector<1x128xf32>
    %242 = arith.mulf %235, %235 : vector<4x128xf32>
    %cst_157 = arith.constant dense<0.000000e+00> : vector<128xf32>
    %243 = vector.multi_reduction <add>, %242, %cst_157 [0] : vector<4x128xf32> to vector<128xf32>
    %244 = vector.shape_cast %243 : vector<128xf32> to vector<1x128xf32>
    %245 = arith.addf %241, %244 : vector<1x128xf32>
    %c7_158 = arith.constant 7 : index
    %c0_159 = arith.constant 0 : index
    %246 = vector.load %arg7[%c7_158, %c0_159] : memref<8x128xf32, #tpu.memory_space<vmem>>, vector<1x128xf32>
    tpu.vector_store %arg7[%c7_158, %c0_159], %245 {strides = array<i32>} : memref<8x128xf32, #tpu.memory_space<vmem>>, vector<1x128xf32>,
    %c0_i32_160 = arith.constant 0 : i32
    %247 = arith.cmpi eq, %arg1, %c0_i32_160 : i32
    %248 = arith.extui %247 : i1 to i32
    %c0_i32_161 = arith.constant 0 : i32
    %249 = arith.cmpi ne, %248, %c0_i32_161 : i32
    scf.if %249 {
      %c0_162 = arith.constant 0 : index
      %c0_163 = arith.constant 0 : index
      %250 = vector.load %arg6[%c0_162, %c0_163] : memref<8x128xf32, #tpu.memory_space<vmem>>, vector<8x128xf32>
      %cst_164 = arith.constant dense<0.000000e+00> : vector<8xf32>
      %251 = vector.multi_reduction <add>, %250, %cst_164 [1] : vector<8x128xf32> to vector<8xf32>
      %252 = vector.shape_cast %251 : vector<8xf32> to vector<8x1xf32>
      %c0_165 = arith.constant 0 : index
      %c0_166 = arith.constant 0 : index
      %c0_167 = arith.constant 0 : index
      %253 = vector.load %arg5[%c0_165, %c0_166, %c0_167] : memref<1x8x2xf32, #tpu.memory_space<vmem>>, vector<1x8x1xf32>
      %254 = vector.shape_cast %253 : vector<1x8x1xf32> to vector<8x1xf32>
      %255 = vector.shape_cast %252 : vector<8x1xf32> to vector<1x8x1xf32>
      tpu.vector_store %arg5[%c0_165, %c0_166, %c0_167], %255 {strides = array<i32>} : memref<1x8x2xf32, #tpu.memory_space<vmem>>, vector<1x8x1xf32>,
      %c0_168 = arith.constant 0 : index
      %c0_169 = arith.constant 0 : index
      %256 = vector.load %arg7[%c0_168, %c0_169] : memref<8x128xf32, #tpu.memory_space<vmem>>, vector<8x128xf32>
      %cst_170 = arith.constant dense<0.000000e+00> : vector<8xf32>
      %257 = vector.multi_reduction <add>, %256, %cst_170 [1] : vector<8x128xf32> to vector<8xf32>
      %258 = vector.shape_cast %257 : vector<8xf32> to vector<8x1xf32>
      %c0_171 = arith.constant 0 : index
      %c0_172 = arith.constant 0 : index
      %c1_173 = arith.constant 1 : index
      %259 = vector.load %arg5[%c0_171, %c0_172, %c1_173] : memref<1x8x2xf32, #tpu.memory_space<vmem>>, vector<1x8x1xf32>
      %260 = vector.shape_cast %259 : vector<1x8x1xf32> to vector<8x1xf32>
      %261 = vector.shape_cast %258 : vector<8x1xf32> to vector<1x8x1xf32>
      tpu.vector_store %arg5[%c0_171, %c0_172, %c1_173], %261 {strides = array<i32>} : memref<1x8x2xf32, #tpu.memory_space<vmem>>, vector<1x8x1xf32>,
    } else {
    }
    return
  }
  func.func @transform_0(%arg0: i32, %arg1: i32) -> (i32, i32, i32, i32) {
    %c0_i32 = arith.constant 0 : i32
    %c0_i32_0 = arith.constant 0 : i32
    %c0_i32_1 = arith.constant 0 : i32
    return %arg0, %c0_i32, %arg1, %c0_i32_0 : i32, i32, i32, i32
  }
  func.func @transform_1(%arg0: i32, %arg1: i32) -> (i32, i32) {
    %c0_i32 = arith.constant 0 : i32
    %c0_i32_0 = arith.constant 0 : i32
    %c0_i32_1 = arith.constant 0 : i32
    return %c0_i32, %c0_i32_0 : i32, i32
  }
  func.func @transform_2(%arg0: i32, %arg1: i32) -> i32 {
    %c0_i32 = arith.constant 0 : i32
    %c0_i32_0 = arith.constant 0 : i32
    return %c0_i32 : i32
  }
  func.func @transform_3(%arg0: i32, %arg1: i32) -> (i32, i32, i32) {
    %c0_i32 = arith.constant 0 : i32
    %c0_i32_0 = arith.constant 0 : i32
    %c0_i32_1 = arith.constant 0 : i32
    return %arg0, %c0_i32, %c0_i32_0 : i32, i32, i32
  }
}

</mosaic_0001>

<llo_original>
// kernel: tpu_custom_call.1
$region0: #{tpu_custom_call.1}
  #allocation0 [shape = 'u32[]', space=smem, size = 0x4, offset = 0x4, fixed_abs, tag = 'smem constant byte address 0x4 - core index']
  #allocation1 [shape = 'u32[144,128]{1,0:T(1,128)}', space=vmem, size = 0x12000, scoped, tag = 'internal scratch']
  #allocation2 [shape = 'f32[8,128]{1,0:T(8,128)}', space=vmem, size = 0x1000, scoped, tag = 'scratch operand']
  #allocation3 [shape = 'f32[8,128]{1,0:T(8,128)}', space=vmem, size = 0x1000, scoped, tag = 'scratch operand']
  %s0 = inlined_call_operand.hbm [shape: f32[2,4,2,128], index: 0, kind: input, shape index: {}]
  %s1 = inlined_call_operand.vmem [shape: f32[8,4], index: 1, kind: input, shape index: {}]
  %s2 = inlined_call_operand.vmem [shape: f32[8], index: 2, kind: input, shape index: {}]
  %s3 = inlined_call_operand.vmem [shape: f32[1,8,2], index: 3, kind: output, shape index: {}]
  %s4 = sld [smem:[#allocation0]]
  $region42: #{tpu_custom_call.1} parent=0
    _
  %s6 = ssub.s32 1, %s4
  %s7 = scalar_select 0, %s6, %s4
  $region1: #{tpu_custom_call.1} parent=0
    #allocation4 [shape = 'u8[8192]{0}', space=vmem, size = 0x2000, scoped, tag = 'input window, operand 0, single buffered']
    #allocation5 [shape = 's32[1]{0}', space=sflag, size = 0x4, scoped, tag = 'scoped memory for tpu_custom_call.1']
    #allocation6 [shape = 's32[1]{0}', space=sflag, size = 0x4, scoped, tag = 'scoped memory for tpu_custom_call.1']
    #allocation7 [shape = 'u8[4096]{0}', space=smem, size = 0x1000, scoped, tag = 'input window, operand 1, single buffered']
    #allocation8 [shape = 'u8[512]{0}', space=smem, size = 0x200, scoped, tag = 'input window, operand 2, single buffered']
    #allocation9 [shape = 's32[1]{0}', space=sflag, size = 0x4, scoped, tag = 'scoped memory for tpu_custom_call.1']
    %8 = vsyncpa [#allocation5], 0
    %9 = vsyncpa [#allocation6], 0
    %10 = vsyncpa [#allocation9], 0
    // Predicated region
    $region2: #{tpu_custom_call.1} parent=1 // pred_check
      _
    $region3: #{tpu_custom_call.1} parent=1 // pred_check_branch
      %12 = sbr.rel (0) target = $region5
    $region4: #{tpu_custom_call.1} parent=1 // pred_region
      %s14 = ssub.s32 256, 256
      %15 = vsyncadd [#allocation5], %s14
      %s16 = sshll.u32 [#allocation4], 4
      %s17 = int_to_ptr.vmem [resolvable:$true] %s16
      %22 = dma.hbm_to_vmem [thread:$0]  %s0, 256, %s17, [#allocation5], 32, 32, 2
    $region5: #{tpu_custom_call.1} parent=1 // pred_fallthru
      _
    // Predicated region
    $region6: #{tpu_custom_call.1} parent=1 // pred_check
      _
    $region7: #{tpu_custom_call.1} parent=1 // pred_check_branch
      %24 = sbr.rel (0) target = $region9
    $region8: #{tpu_custom_call.1} parent=1 // pred_region
      %s26 = ssub.s32 128, 128
      %27 = vsyncadd [#allocation6], %s26
      %s29 = sshll.u32 %s1, 4
      %s30 = int_to_ptr.vmem [resolvable:$true] %s29
      %32 = dma.vmem_to_smem %s30, 128, [#allocation7], [#allocation6]
    $region9: #{tpu_custom_call.1} parent=1 // pred_fallthru
      _
    // Predicated region
    $region10: #{tpu_custom_call.1} parent=1 // pred_check
      _
    $region11: #{tpu_custom_call.1} parent=1 // pred_check_branch
      %34 = sbr.rel (0) target = $region13
    $region12: #{tpu_custom_call.1} parent=1 // pred_region
      %s36 = ssub.s32 16, 16
      %37 = vsyncadd [#allocation9], %s36
      %s39 = sshll.u32 %s2, 4
      %s40 = int_to_ptr.vmem [resolvable:$true] %s39
      %42 = dma.vmem_to_smem %s40, 16, [#allocation8], [#allocation9]
    $region13: #{tpu_custom_call.1} parent=1 // pred_fallthru
      _
    // Predicated region
    $region14: #{tpu_custom_call.1} parent=1 // pred_check
      _
    $region15: #{tpu_custom_call.1} parent=1 // pred_check_branch
      %44 = sbr.rel (0) target = $region17
    $region16: #{tpu_custom_call.1} parent=1 // pred_region
      %45 = dma.done [#allocation5], 256
    $region17: #{tpu_custom_call.1} parent=1 // pred_fallthru
      _
    // Predicated region
    $region18: #{tpu_custom_call.1} parent=1 // pred_check
      _
    $region19: #{tpu_custom_call.1} parent=1 // pred_check_branch
      %47 = sbr.rel (0) target = $region21
    $region20: #{tpu_custom_call.1} parent=1 // pred_region
      %48 = dma.done [#allocation6], 128
    $region21: #{tpu_custom_call.1} parent=1 // pred_fallthru
      _
    // Predicated region
    $region22: #{tpu_custom_call.1} parent=1 // pred_check
      _
    $region23: #{tpu_custom_call.1} parent=1 // pred_check_branch
      %50 = sbr.rel (0) target = $region25
    $region24: #{tpu_custom_call.1} parent=1 // pred_region
      %51 = dma.done [#allocation9], 16
    $region25: #{tpu_custom_call.1} parent=1 // pred_fallthru
      _
    %52 = sfence
    %p53 = scmp.eq.s32.totalorder 0, 0
    // Predicated region
    $region26: #{tpu_custom_call.1} parent=1 // pred_check
      %p54 = pneg %p53
    $region27: #{tpu_custom_call.1} parent=1 // pred_check_branch
      %56 = sbr.rel (%p54) target = $region29
    $region28: #{tpu_custom_call.1} parent=1 // pred_region
      %57 = vst [vmem:[#allocation2] sm:$0xff] 0.0
      %58 = vst [vmem:[#allocation3] sm:$0xff] 0.0
    $region29: #{tpu_custom_call.1} parent=1 // pred_fallthru
      _
    %v59 = vld [vmem:[#allocation4] sm:$0x3]
    %v60 = vld [vmem:[#allocation4 + $0x8] sm:$0x3]
    %s61 = scalar_lea.vmem [#allocation4], 2
    %v62 = vld [vmem:[%s61] sm:$0x3]
    %v63 = vld [vmem:[%s61 + $0x8] sm:$0x3]
    %s64 = scalar_lea.vmem [#allocation4], 4
    %v65 = vld [vmem:[%s64] sm:$0x3]
    %v66 = vld [vmem:[%s64 + $0x8] sm:$0x3]
    %s67 = scalar_lea.vmem [#allocation4], 6
    %v68 = vld [vmem:[%s67] sm:$0x3]
    %v69 = vld [vmem:[%s67 + $0x8] sm:$0x3]
    %s70 = sld [smem:[#allocation7]]
    %v71 = vstv %s70
    %v72 = vmul.f32 %v59, %v71
    %v73 = vmul.f32 %v60, %v71
    %s74 = sld [smem:[#allocation7 + $0x1]]
    %v75 = vstv %s74
    %v76 = vmul.f32 %v62, %v75
    %v77 = vmul.f32 %v63, %v75
    %s78 = sld [smem:[#allocation7 + $0x2]]
    %v79 = vstv %s78
    %v80 = vmul.f32 %v65, %v79
    %v81 = vmul.f32 %v66, %v79
    %s82 = sld [smem:[#allocation7 + $0x3]]
    %v83 = vstv %s82
    %v84 = vmul.f32 %v68, %v83
    %v85 = vmul.f32 %v69, %v83
    %v86 = vadd.f32 %v72, %v76
    %v87 = vadd.f32 %v73, %v77
    %v88 = vadd.f32 %v80, %v84
    %v89 = vadd.f32 %v81, %v85
    %v90 = vadd.f32 %v86, %v88
    %v91 = vadd.f32 %v87, %v89
    %s92 = sld [smem:[#allocation8]]
    %v93 = vstv %s92
    %v94 = vadd.f32 %v90, %v93
    %v95 = vadd.f32 %v91, %v93
    %v96 = vld [vmem:[#allocation2] sm:$0x1]
    %v99 = vcombine.low %v94, %v95
    %v101 = vunpack.c.l.s4 1983009808
    %v102 = vunpack.c.0.s8 %v101
    %v103 = vlaneseq
    %v104 = vshrl.u32 %v103, 7
    %v105 = vsub.s32 %v102, %v104
    %v106 = vrot.slane %v99, %v105
    %vm108 = vcmask 1043456
    %v109 = vsel %vm108, %v106, 0.0
    %v110 = vrot.slane %v109, 4
    %v111 = vadd.f32 %v109, %v110
    %v112 = vrot.slane %v111, 2
    %v113 = vadd.f32 %v111, %v112
    %v114 = vrot.slane %v113, 1
    %v115 = vadd.f32 %v113, %v114
    %v116 = vadd.f32 %v96, %v115
    %117 = vst [vmem:[#allocation2] sm:$0x1] %v116
    %v118 = vld [vmem:[#allocation3] sm:$0x1]
    %v119 = vmul.f32 %v94, %v94
    %v120 = vmul.f32 %v95, %v95
    %v123 = vcombine.low %v119, %v120
    %v125 = vunpack.c.l.s4 1983009808
    %v126 = vunpack.c.0.s8 %v125
    %v127 = vlaneseq
    %v128 = vshrl.u32 %v127, 7
    %v129 = vsub.s32 %v126, %v128
    %v130 = vrot.slane %v123, %v129
    %v132 = vsel %vm108, %v130, 0.0
    %v133 = vrot.slane %v132, 4
    %v134 = vadd.f32 %v132, %v133
    %v135 = vrot.slane %v134, 2
    %v136 = vadd.f32 %v134, %v135
    %v137 = vrot.slane %v136, 1
    %v138 = vadd.f32 %v136, %v137
    %v139 = vadd.f32 %v118, %v138
    %140 = vst [vmem:[#allocation3] sm:$0x1] %v139
    %s141 = sld [smem:[#allocation7 + $0x80]]
    %v142 = vstv %s141
    %v143 = vmul.f32 %v59, %v142
    %v144 = vmul.f32 %v60, %v142
    %s145 = sld [smem:[#allocation7 + $0x81]]
    %v146 = vstv %s145
    %v147 = vmul.f32 %v62, %v146
    %v148 = vmul.f32 %v63, %v146
    %s149 = sld [smem:[#allocation7 + $0x82]]
    %v150 = vstv %s149
    %v151 = vmul.f32 %v65, %v150
    %v152 = vmul.f32 %v66, %v150
    %s153 = sld [smem:[#allocation7 + $0x83]]
    %v154 = vstv %s153
    %v155 = vmul.f32 %v68, %v154
    %v156 = vmul.f32 %v69, %v154
    %v157 = vadd.f32 %v143, %v147
    %v158 = vadd.f32 %v144, %v148
    %v159 = vadd.f32 %v151, %v155
    %v160 = vadd.f32 %v152, %v156
    %v161 = vadd.f32 %v157, %v159
    %v162 = vadd.f32 %v158, %v160
    %s163 = sld [smem:[#allocation8 + $0x1]]
    %v164 = vstv %s163
    %v165 = vadd.f32 %v161, %v164
    %v166 = vadd.f32 %v162, %v164
    %v167 = vld [vmem:[#allocation2 + $0x1] sm:$0x1]
    %v170 = vcombine.low %v165, %v166
    %v172 = vunpack.c.l.s4 1983009808
    %v173 = vunpack.c.0.s8 %v172
    %v174 = vlaneseq
    %v175 = vshrl.u32 %v174, 7
    %v176 = vsub.s32 %v173, %v175
    %v177 = vrot.slane %v170, %v176
    %v179 = vsel %vm108, %v177, 0.0
    %v180 = vrot.slane %v179, 4
    %v181 = vadd.f32 %v179, %v180
    %v182 = vrot.slane %v181, 2
    %v183 = vadd.f32 %v181, %v182
    %v184 = vrot.slane %v183, 1
    %v185 = vadd.f32 %v183, %v184
    %v186 = vadd.f32 %v167, %v185
    %187 = vst [vmem:[#allocation2 + $0x1] sm:$0x1] %v186
    %v188 = vld [vmem:[#allocation3 + $0x1] sm:$0x1]
    %v189 = vmul.f32 %v165, %v165
    %v190 = vmul.f32 %v166, %v166
    %v193 = vcombine.low %v189, %v190
    %v195 = vunpack.c.l.s4 1983009808
    %v196 = vunpack.c.0.s8 %v195
    %v197 = vlaneseq
    %v198 = vshrl.u32 %v197, 7
    %v199 = vsub.s32 %v196, %v198
    %v200 = vrot.slane %v193, %v199
    %v202 = vsel %vm108, %v200, 0.0
    %v203 = vrot.slane %v202, 4
    %v204 = vadd.f32 %v202, %v203
    %v205 = vrot.slane %v204, 2
    %v206 = vadd.f32 %v204, %v205
    %v207 = vrot.slane %v206, 1
    %v208 = vadd.f32 %v206, %v207
    %v209 = vadd.f32 %v188, %v208
    %210 = vst [vmem:[#allocation3 + $0x1] sm:$0x1] %v209
    %s211 = sld [smem:[#allocation7 + $0x100]]
    %v212 = vstv %s211
    %v213 = vmul.f32 %v59, %v212
    %v214 = vmul.f32 %v60, %v212
    %s215 = sld [smem:[#allocation7 + $0x101]]
    %v216 = vstv %s215
    %v217 = vmul.f32 %v62, %v216
    %v218 = vmul.f32 %v63, %v216
    %s219 = sld [smem:[#allocation7 + $0x102]]
    %v220 = vstv %s219
    %v221 = vmul.f32 %v65, %v220
    %v222 = vmul.f32 %v66, %v220
    %s223 = sld [smem:[#allocation7 + $0x103]]
    %v224 = vstv %s223
    %v225 = vmul.f32 %v68, %v224
    %v226 = vmul.f32 %v69, %v224
    %v227 = vadd.f32 %v213, %v217
    %v228 = vadd.f32 %v214, %v218
    %v229 = vadd.f32 %v221, %v225
    %v230 = vadd.f32 %v222, %v226
    %v231 = vadd.f32 %v227, %v229
    %v232 = vadd.f32 %v228, %v230
    %s233 = sld [smem:[#allocation8 + $0x2]]
    %v234 = vstv %s233
    %v235 = vadd.f32 %v231, %v234
    %v236 = vadd.f32 %v232, %v234
    %v237 = vld [vmem:[#allocation2 + $0x2] sm:$0x1]
    %v240 = vcombine.low %v235, %v236
    %v242 = vunpack.c.l.s4 1983009808
    %v243 = vunpack.c.0.s8 %v242
    %v244 = vlaneseq
    %v245 = vshrl.u32 %v244, 7
    %v246 = vsub.s32 %v243, %v245
    %v247 = vrot.slane %v240, %v246
    %v249 = vsel %vm108, %v247, 0.0
    %v250 = vrot.slane %v249, 4
    %v251 = vadd.f32 %v249, %v250
    %v252 = vrot.slane %v251, 2
    %v253 = vadd.f32 %v251, %v252
    %v254 = vrot.slane %v253, 1
    %v255 = vadd.f32 %v253, %v254
    %v256 = vadd.f32 %v237, %v255
    %257 = vst [vmem:[#allocation2 + $0x2] sm:$0x1] %v256
    %v258 = vld [vmem:[#allocation3 + $0x2] sm:$0x1]
    %v259 = vmul.f32 %v235, %v235
    %v260 = vmul.f32 %v236, %v236
    %v263 = vcombine.low %v259, %v260
    %v265 = vunpack.c.l.s4 1983009808
    %v266 = vunpack.c.0.s8 %v265
    %v267 = vlaneseq
    %v268 = vshrl.u32 %v267, 7
    %v269 = vsub.s32 %v266, %v268
    %v270 = vrot.slane %v263, %v269
    %v272 = vsel %vm108, %v270, 0.0
    %v273 = vrot.slane %v272, 4
    %v274 = vadd.f32 %v272, %v273
    %v275 = vrot.slane %v274, 2
    %v276 = vadd.f32 %v274, %v275
    %v277 = vrot.slane %v276, 1
    %v278 = vadd.f32 %v276, %v277
    %v279 = vadd.f32 %v258, %v278
    %280 = vst [vmem:[#allocation3 + $0x2] sm:$0x1] %v279
    %s281 = sld [smem:[#allocation7 + $0x180]]
    %v282 = vstv %s281
    %v283 = vmul.f32 %v59, %v282
    %v284 = vmul.f32 %v60, %v282
    %s285 = sld [smem:[#allocation7 + $0x181]]
    %v286 = vstv %s285
    %v287 = vmul.f32 %v62, %v286
    %v288 = vmul.f32 %v63, %v286
    %s289 = sld [smem:[#allocation7 + $0x182]]
    %v290 = vstv %s289
    %v291 = vmul.f32 %v65, %v290
    %v292 = vmul.f32 %v66, %v290
    %s293 = sld [smem:[#allocation7 + $0x183]]
    %v294 = vstv %s293
    %v295 = vmul.f32 %v68, %v294
    %v296 = vmul.f32 %v69, %v294
    %v297 = vadd.f32 %v283, %v287
    %v298 = vadd.f32 %v284, %v288
    %v299 = vadd.f32 %v291, %v295
    %v300 = vadd.f32 %v292, %v296
    %v301 = vadd.f32 %v297, %v299
    %v302 = vadd.f32 %v298, %v300
    %s303 = sld [smem:[#allocation8 + $0x3]]
    %v304 = vstv %s303
    %v305 = vadd.f32 %v301, %v304
    %v306 = vadd.f32 %v302, %v304
    %v307 = vld [vmem:[#allocation2 + $0x3] sm:$0x1]
    %v310 = vcombine.low %v305, %v306
    %v312 = vunpack.c.l.s4 1983009808
    %v313 = vunpack.c.0.s8 %v312
    %v314 = vlaneseq
    %v315 = vshrl.u32 %v314, 7
    %v316 = vsub.s32 %v313, %v315
    %v317 = vrot.slane %v310, %v316
    %v319 = vsel %vm108, %v317, 0.0
    %v320 = vrot.slane %v319, 4
    %v321 = vadd.f32 %v319, %v320
    %v322 = vrot.slane %v321, 2
    %v323 = vadd.f32 %v321, %v322
    %v324 = vrot.slane %v323, 1
    %v325 = vadd.f32 %v323, %v324
    %v326 = vadd.f32 %v307, %v325
    %327 = vst [vmem:[#allocation2 + $0x3] sm:$0x1] %v326
    %v328 = vld [vmem:[#allocation3 + $0x3] sm:$0x1]
    %v329 = vmul.f32 %v305, %v305
    %v330 = vmul.f32 %v306, %v306
    %v333 = vcombine.low %v329, %v330
    %v335 = vunpack.c.l.s4 1983009808
    %v336 = vunpack.c.0.s8 %v335
    %v337 = vlaneseq
    %v338 = vshrl.u32 %v337, 7
    %v339 = vsub.s32 %v336, %v338
    %v340 = vrot.slane %v333, %v339
    %v342 = vsel %vm108, %v340, 0.0
    %v343 = vrot.slane %v342, 4
    %v344 = vadd.f32 %v342, %v343
    %v345 = vrot.slane %v344, 2
    %v346 = vadd.f32 %v344, %v345
    %v347 = vrot.slane %v346, 1
    %v348 = vadd.f32 %v346, %v347
    %v349 = vadd.f32 %v328, %v348
    %350 = vst [vmem:[#allocation3 + $0x3] sm:$0x1] %v349
    %s351 = sld [smem:[#allocation7 + $0x200]]
    %v352 = vstv %s351
    %v353 = vmul.f32 %v59, %v352
    %v354 = vmul.f32 %v60, %v352
    %s355 = sld [smem:[#allocation7 + $0x201]]
    %v356 = vstv %s355
    %v357 = vmul.f32 %v62, %v356
    %v358 = vmul.f32 %v63, %v356
    %s359 = sld [smem:[#allocation7 + $0x202]]
    %v360 = vstv %s359
    %v361 = vmul.f32 %v65, %v360
    %v362 = vmul.f32 %v66, %v360
    %s363 = sld [smem:[#allocation7 + $0x203]]
    %v364 = vstv %s363
    %v365 = vmul.f32 %v68, %v364
    %v366 = vmul.f32 %v69, %v364
    %v367 = vadd.f32 %v353, %v357
    %v368 = vadd.f32 %v354, %v358
    %v369 = vadd.f32 %v361, %v365
    %v370 = vadd.f32 %v362, %v366
    %v371 = vadd.f32 %v367, %v369
    %v372 = vadd.f32 %v368, %v370
    %s373 = sld [smem:[#allocation8 + $0x4]]
    %v374 = vstv %s373
    %v375 = vadd.f32 %v371, %v374
    %v376 = vadd.f32 %v372, %v374
    %v377 = vld [vmem:[#allocation2 + $0x4] sm:$0x1]
    %v380 = vcombine.low %v375, %v376
    %v382 = vunpack.c.l.s4 1983009808
    %v383 = vunpack.c.0.s8 %v382
    %v384 = vlaneseq
    %v385 = vshrl.u32 %v384, 7
    %v386 = vsub.s32 %v383, %v385
    %v387 = vrot.slane %v380, %v386
    %v389 = vsel %vm108, %v387, 0.0
    %v390 = vrot.slane %v389, 4
    %v391 = vadd.f32 %v389, %v390
    %v392 = vrot.slane %v391, 2
    %v393 = vadd.f32 %v391, %v392
    %v394 = vrot.slane %v393, 1
    %v395 = vadd.f32 %v393, %v394
    %v396 = vadd.f32 %v377, %v395
    %397 = vst [vmem:[#allocation2 + $0x4] sm:$0x1] %v396
    %v398 = vld [vmem:[#allocation3 + $0x4] sm:$0x1]
    %v399 = vmul.f32 %v375, %v375
    %v400 = vmul.f32 %v376, %v376
    %v403 = vcombine.low %v399, %v400
    %v405 = vunpack.c.l.s4 1983009808
    %v406 = vunpack.c.0.s8 %v405
    %v407 = vlaneseq
    %v408 = vshrl.u32 %v407, 7
    %v409 = vsub.s32 %v406, %v408
    %v410 = vrot.slane %v403, %v409
    %v412 = vsel %vm108, %v410, 0.0
    %v413 = vrot.slane %v412, 4
    %v414 = vadd.f32 %v412, %v413
    %v415 = vrot.slane %v414, 2
    %v416 = vadd.f32 %v414, %v415
    %v417 = vrot.slane %v416, 1
    %v418 = vadd.f32 %v416, %v417
    %v419 = vadd.f32 %v398, %v418
    %420 = vst [vmem:[#allocation3 + $0x4] sm:$0x1] %v419
    %s421 = sld [smem:[#allocation7 + $0x280]]
    %v422 = vstv %s421
    %v423 = vmul.f32 %v59, %v422
    %v424 = vmul.f32 %v60, %v422
    %s425 = sld [smem:[#allocation7 + $0x281]]
    %v426 = vstv %s425
    %v427 = vmul.f32 %v62, %v426
    %v428 = vmul.f32 %v63, %v426
    %s429 = sld [smem:[#allocation7 + $0x282]]
    %v430 = vstv %s429
    %v431 = vmul.f32 %v65, %v430
    %v432 = vmul.f32 %v66, %v430
    %s433 = sld [smem:[#allocation7 + $0x283]]
    %v434 = vstv %s433
    %v435 = vmul.f32 %v68, %v434
    %v436 = vmul.f32 %v69, %v434
    %v437 = vadd.f32 %v423, %v427
    %v438 = vadd.f32 %v424, %v428
    %v439 = vadd.f32 %v431, %v435
    %v440 = vadd.f32 %v432, %v436
    %v441 = vadd.f32 %v437, %v439
    %v442 = vadd.f32 %v438, %v440
    %s443 = sld [smem:[#allocation8 + $0x5]]
    %v444 = vstv %s443
    %v445 = vadd.f32 %v441, %v444
    %v446 = vadd.f32 %v442, %v444
    %v447 = vld [vmem:[#allocation2 + $0x5] sm:$0x1]
    %v450 = vcombine.low %v445, %v446
    %v452 = vunpack.c.l.s4 1983009808
    %v453 = vunpack.c.0.s8 %v452
    %v454 = vlaneseq
    %v455 = vshrl.u32 %v454, 7
    %v456 = vsub.s32 %v453, %v455
    %v457 = vrot.slane %v450, %v456
    %v459 = vsel %vm108, %v457, 0.0
    %v460 = vrot.slane %v459, 4
    %v461 = vadd.f32 %v459, %v460
    %v462 = vrot.slane %v461, 2
    %v463 = vadd.f32 %v461, %v462
    %v464 = vrot.slane %v463, 1
    %v465 = vadd.f32 %v463, %v464
    %v466 = vadd.f32 %v447, %v465
    %467 = vst [vmem:[#allocation2 + $0x5] sm:$0x1] %v466
    %v468 = vld [vmem:[#allocation3 + $0x5] sm:$0x1]
    %v469 = vmul.f32 %v445, %v445
    %v470 = vmul.f32 %v446, %v446
    %v473 = vcombine.low %v469, %v470
    %v475 = vunpack.c.l.s4 1983009808
    %v476 = vunpack.c.0.s8 %v475
    %v477 = vlaneseq
    %v478 = vshrl.u32 %v477, 7
    %v479 = vsub.s32 %v476, %v478
    %v480 = vrot.slane %v473, %v479
    %v482 = vsel %vm108, %v480, 0.0
    %v483 = vrot.slane %v482, 4
    %v484 = vadd.f32 %v482, %v483
    %v485 = vrot.slane %v484, 2
    %v486 = vadd.f32 %v484, %v485
    %v487 = vrot.slane %v486, 1
    %v488 = vadd.f32 %v486, %v487
    %v489 = vadd.f32 %v468, %v488
    %490 = vst [vmem:[#allocation3 + $0x5] sm:$0x1] %v489
    %s491 = sld [smem:[#allocation7 + $0x300]]
    %v492 = vstv %s491
    %v493 = vmul.f32 %v59, %v492
    %v494 = vmul.f32 %v60, %v492
    %s495 = sld [smem:[#allocation7 + $0x301]]
    %v496 = vstv %s495
    %v497 = vmul.f32 %v62, %v496
    %v498 = vmul.f32 %v63, %v496
    %s499 = sld [smem:[#allocation7 + $0x302]]
    %v500 = vstv %s499
    %v501 = vmul.f32 %v65, %v500
    %v502 = vmul.f32 %v66, %v500
    %s503 = sld [smem:[#allocation7 + $0x303]]
    %v504 = vstv %s503
    %v505 = vmul.f32 %v68, %v504
    %v506 = vmul.f32 %v69, %v504
    %v507 = vadd.f32 %v493, %v497
    %v508 = vadd.f32 %v494, %v498
    %v509 = vadd.f32 %v501, %v505
    %v510 = vadd.f32 %v502, %v506
    %v511 = vadd.f32 %v507, %v509
    %v512 = vadd.f32 %v508, %v510
    %s513 = sld [smem:[#allocation8 + $0x6]]
    %v514 = vstv %s513
    %v515 = vadd.f32 %v511, %v514
    %v516 = vadd.f32 %v512, %v514
    %v517 = vld [vmem:[#allocation2 + $0x6] sm:$0x1]
    %v520 = vcombine.low %v515, %v516
    %v522 = vunpack.c.l.s4 1983009808
    %v523 = vunpack.c.0.s8 %v522
    %v524 = vlaneseq
    %v525 = vshrl.u32 %v524, 7
    %v526 = vsub.s32 %v523, %v525
    %v527 = vrot.slane %v520, %v526
    %v529 = vsel %vm108, %v527, 0.0
    %v530 = vrot.slane %v529, 4
    %v531 = vadd.f32 %v529, %v530
    %v532 = vrot.slane %v531, 2
    %v533 = vadd.f32 %v531, %v532
    %v534 = vrot.slane %v533, 1
    %v535 = vadd.f32 %v533, %v534
    %v536 = vadd.f32 %v517, %v535
    %537 = vst [vmem:[#allocation2 + $0x6] sm:$0x1] %v536
    %v538 = vld [vmem:[#allocation3 + $0x6] sm:$0x1]
    %v539 = vmul.f32 %v515, %v515
    %v540 = vmul.f32 %v516, %v516
    %v543 = vcombine.low %v539, %v540
    %v545 = vunpack.c.l.s4 1983009808
    %v546 = vunpack.c.0.s8 %v545
    %v547 = vlaneseq
    %v548 = vshrl.u32 %v547, 7
    %v549 = vsub.s32 %v546, %v548
    %v550 = vrot.slane %v543, %v549
    %v552 = vsel %vm108, %v550, 0.0
    %v553 = vrot.slane %v552, 4
    %v554 = vadd.f32 %v552, %v553
    %v555 = vrot.slane %v554, 2
    %v556 = vadd.f32 %v554, %v555
    %v557 = vrot.slane %v556, 1
    %v558 = vadd.f32 %v556, %v557
    %v559 = vadd.f32 %v538, %v558
    %560 = vst [vmem:[#allocation3 + $0x6] sm:$0x1] %v559
    %s561 = sld [smem:[#allocation7 + $0x380]]
    %v562 = vstv %s561
    %v563 = vmul.f32 %v59, %v562
    %v564 = vmul.f32 %v60, %v562
    %s565 = sld [smem:[#allocation7 + $0x381]]
    %v566 = vstv %s565
    %v567 = vmul.f32 %v62, %v566
    %v568 = vmul.f32 %v63, %v566
    %s569 = sld [smem:[#allocation7 + $0x382]]
    %v570 = vstv %s569
    %v571 = vmul.f32 %v65, %v570
    %v572 = vmul.f32 %v66, %v570
    %s573 = sld [smem:[#allocation7 + $0x383]]
    %v574 = vstv %s573
    %v575 = vmul.f32 %v68, %v574
    %v576 = vmul.f32 %v69, %v574
    %v577 = vadd.f32 %v563, %v567
    %v578 = vadd.f32 %v564, %v568
    %v579 = vadd.f32 %v571, %v575
    %v580 = vadd.f32 %v572, %v576
    %v581 = vadd.f32 %v577, %v579
    %v582 = vadd.f32 %v578, %v580
    %s583 = sld [smem:[#allocation8 + $0x7]]
    %v584 = vstv %s583
    %v585 = vadd.f32 %v581, %v584
    %v586 = vadd.f32 %v582, %v584
    %v587 = vld [vmem:[#allocation2 + $0x7] sm:$0x1]
    %v590 = vcombine.low %v585, %v586
    %v592 = vunpack.c.l.s4 1983009808
    %v593 = vunpack.c.0.s8 %v592
    %v594 = vlaneseq
    %v595 = vshrl.u32 %v594, 7
    %v596 = vsub.s32 %v593, %v595
    %v597 = vrot.slane %v590, %v596
    %v599 = vsel %vm108, %v597, 0.0
    %v600 = vrot.slane %v599, 4
    %v601 = vadd.f32 %v599, %v600
    %v602 = vrot.slane %v601, 2
    %v603 = vadd.f32 %v601, %v602
    %v604 = vrot.slane %v603, 1
    %v605 = vadd.f32 %v603, %v604
    %v606 = vadd.f32 %v587, %v605
    %607 = vst [vmem:[#allocation2 + $0x7] sm:$0x1] %v606
    %v608 = vld [vmem:[#allocation3 + $0x7] sm:$0x1]
    %v609 = vmul.f32 %v585, %v585
    %v610 = vmul.f32 %v586, %v586
    %v613 = vcombine.low %v609, %v610
    %v615 = vunpack.c.l.s4 1983009808
    %v616 = vunpack.c.0.s8 %v615
    %v617 = vlaneseq
    %v618 = vshrl.u32 %v617, 7
    %v619 = vsub.s32 %v616, %v618
    %v620 = vrot.slane %v613, %v619
    %v622 = vsel %vm108, %v620, 0.0
    %v623 = vrot.slane %v622, 4
    %v624 = vadd.f32 %v622, %v623
    %v625 = vrot.slane %v624, 2
    %v626 = vadd.f32 %v624, %v625
    %v627 = vrot.slane %v626, 1
    %v628 = vadd.f32 %v626, %v627
    %v629 = vadd.f32 %v608, %v628
    %630 = vst [vmem:[#allocation3 + $0x7] sm:$0x1] %v629
    // Predicated region
    $region30: #{tpu_custom_call.1} parent=1 // pred_check
      %p631 = pneg %p53
    $region31: #{tpu_custom_call.1} parent=1 // pred_check_branch
      %633 = sbr.rel (%p631) target = $region33
    $region32: #{tpu_custom_call.1} parent=1 // pred_region
      %v634 = vld [vmem:[#allocation2] sm:$0xff]
      %635 = vadd.xlane.f32.xlu0 %v634
      %v636 = vpop.xlane.xlu0 %635
      %vm637 = vcmask 7168
      %638 = vst.msk [vmem:[%s3] sm:$0xff] %vm637, %v636
      %v639 = vld [vmem:[#allocation3] sm:$0xff]
      %640 = vadd.xlane.f32.xlu0 %v639
      %v641 = vpop.xlane.xlu0 %640
      %vm642 = vcmask 15368
      %643 = vst.msk [vmem:[%s3] sm:$0xff] %vm642, %v641
    $region33: #{tpu_custom_call.1} parent=1 // pred_fallthru
      _
    // Predicated region
    $region34: #{tpu_custom_call.1} parent=1 // pred_check
      _
    $region35: #{tpu_custom_call.1} parent=1 // pred_check_branch
      %645 = sbr.rel (0) target = $region37
    $region36: #{tpu_custom_call.1} parent=1 // pred_region
      _
    $region37: #{tpu_custom_call.1} parent=1 // pred_fallthru
      _
    // Predicated region
    $region38: #{tpu_custom_call.1} parent=1 // pred_check
      _
    $region39: #{tpu_custom_call.1} parent=1 // pred_check_branch
      %647 = sbr.rel (0) target = $region41
    $region40: #{tpu_custom_call.1} parent=1 // pred_region
      _
    $region41: #{tpu_custom_call.1} parent=1 // pred_fallthru
      _
    %648 = vsyncpa [#allocation5], 1
    %649 = vsyncpa [#allocation6], 1
    %650 = vsyncpa [#allocation9], 1

</llo_original>
